<compile_context>
chip_gen: v7x
topology: tpu7x:2x2x1
jax: 0.10.0
libtpu: 0.0.40
codegen_flags: <defaults>
</compile_context>

<pallas_src>
import jax
import jax.numpy as jnp
from jax import lax
from jax.experimental import pallas as pl
from jax.experimental.pallas import tpu as pltpu


def _round_up(x, m):
    return -(-x // m) * m


# ----------------------------- kernels -----------------------------

def _linear_kernel(x_ref, w_ref, b_ref, o_ref, acc_ref):
    """Eval path: y = x @ W^T + b (no noise inputs at all)."""
    k = pl.program_id(2)

    @pl.when(k == 0)
    def _():
        acc_ref[...] = jnp.zeros_like(acc_ref)

    acc_ref[...] += lax.dot_general(
        x_ref[...], w_ref[...],
        dimension_numbers=(((1,), (1,)), ((), ())),
        preferred_element_type=jnp.float32)

    @pl.when(k == pl.num_programs(2) - 1)
    def _():
        o_ref[...] = (acc_ref[...] + b_ref[...]).astype(o_ref.dtype)


def _noisy_rank1_kernel(x_ref, w_ref, wnrow_ref, b_ref, bn_ref, o_ref, acc_ref):
    """Training path with factorized (rank-1) weight noise: wn_row is [1, tk]."""
    k = pl.program_id(2)

    @pl.when(k == 0)
    def _():
        acc_ref[...] = jnp.zeros_like(acc_ref)

    x = x_ref[...]
    acc_ref[...] += lax.dot_general(
        x, w_ref[...],
        dimension_numbers=(((1,), (1,)), ((), ())),
        preferred_element_type=jnp.float32)
    # x @ W_noise^T with rank-1 W_noise == per-row scalar broadcast over columns.
    noise = jnp.sum(x.astype(jnp.float32) * wnrow_ref[...], axis=-1, keepdims=True)
    acc_ref[...] += noise

    @pl.when(k == pl.num_programs(2) - 1)
    def _():
        o_ref[...] = (acc_ref[...] + b_ref[...] + bn_ref[...]).astype(o_ref.dtype)


def _noisy_full_kernel(x_ref, w_ref, wn_ref, b_ref, bn_ref, o_ref, acc_ref):
    """Training fallback for an arbitrary (non-factorized) [out, in] noise buffer."""
    k = pl.program_id(2)

    @pl.when(k == 0)
    def _():
        acc_ref[...] = jnp.zeros_like(acc_ref)

    w = w_ref[...] + wn_ref[...]
    acc_ref[...] += lax.dot_general(
        x_ref[...], w,
        dimension_numbers=(((1,), (1,)), ((), ())),
        preferred_element_type=jnp.float32)

    @pl.when(k == pl.num_programs(2) - 1)
    def _():
        o_ref[...] = (acc_ref[...] + b_ref[...] + bn_ref[...]).astype(o_ref.dtype)


# ----------------------------- wrapper -----------------------------

def noisy_linear(x, weight, weight_noise, bias, bias_noise, *,
                 training=True, factorized_noise=True,
                 tm=None, tn=None, tk=None, compute_dtype=None):
    """Pallas forward for NoisyLinear.

    x:            [B, in_features]
    weight:       [out_features, in_features]
    weight_noise: [out_features, in_features] buffer (rank-1 in the reference
                  module) or a [in_features] vector when factorized_noise=True.
    bias:         [out_features]
    bias_noise:   [out_features]

    `training` and `factorized_noise` must be static Python bools (they pick the
    kernel variant at trace time).  `compute_dtype` (e.g. jnp.bfloat16) casts the
    matmul operands only; accumulation / bias epilogue stay in float32.
    """
    B, in_f = x.shape
    out_f = weight.shape[0]
    out_dtype = x.dtype

    if compute_dtype is not None:
        x = x.astype(compute_dtype)
        weight = weight.astype(compute_dtype)

    # ---- pad to lane/sublane-friendly shapes (sliced off after the call) ----
    Bp = _round_up(B, 8)
    Np = _round_up(out_f, 128)
    Kp = _round_up(in_f, 128)
    tm = tm if tm is not None else min(Bp, 256)
    tn = tn if tn is not None else min(Np, 256)
    tk = tk if tk is not None else min(Kp, 512)
    Bp, Np, Kp = _round_up(Bp, tm), _round_up(Np, tn), _round_up(Kp, tk)

    xp = jnp.pad(x, ((0, Bp - B), (0, Kp - in_f)))
    wp = jnp.pad(weight, ((0, Np - out_f), (0, Kp - in_f)))
    bp = jnp.pad(bias.astype(jnp.float32).reshape(1, out_f),
                 ((0, 0), (0, Np - out_f)))

    grid = (Bp // tm, Np // tn, Kp // tk)
    x_spec = pl.BlockSpec((tm, tk), lambda i, j, k: (i, k))
    w_spec = pl.BlockSpec((tn, tk), lambda i, j, k: (j, k))
    row_k_spec = pl.BlockSpec((1, tk), lambda i, j, k: (0, k))
    row_n_spec = pl.BlockSpec((1, tn), lambda i, j, k: (0, j))
    o_spec = pl.BlockSpec((tm, tn), lambda i, j, k: (i, j))

    common = dict(
        out_shape=jax.ShapeDtypeStruct((Bp, Np), out_dtype),
        compiler_params=pltpu.CompilerParams(
            dimension_semantics=("parallel", "parallel", "arbitrary")),
    )
    scratch = [pltpu.VMEM((tm, tn), jnp.float32)]

    if not training:
        # Statically specialized eval kernel: no noise inputs, no dead work.
        y = pl.pallas_call(
            _linear_kernel,
            grid_spec=pltpu.PrefetchScalarGridSpec(
                num_scalar_prefetch=0, grid=grid,
                in_specs=[x_spec, w_spec, row_n_spec],
                out_specs=o_spec, scratch_shapes=scratch),
            **common)(xp, wp, bp)
    else:
        bnp = jnp.pad(bias_noise.astype(jnp.float32).reshape(1, out_f),
                      ((0, 0), (0, Np - out_f)))
        if factorized_noise:
            wn_row = (weight_noise[:1, :] if weight_noise.ndim == 2
                      else weight_noise.reshape(1, in_f))
            wn_row = jnp.pad(wn_row.astype(jnp.float32),
                             ((0, 0), (0, Kp - in_f)))
            y = pl.pallas_call(
                _noisy_rank1_kernel,
                grid_spec=pltpu.PrefetchScalarGridSpec(
                    num_scalar_prefetch=0, grid=grid,
                    in_specs=[x_spec, w_spec, row_k_spec, row_n_spec, row_n_spec],
                    out_specs=o_spec, scratch_shapes=scratch),
                **common)(xp, wp, wn_row, bp, bnp)
        else:
            wn = jnp.pad(weight_noise.astype(wp.dtype),
                         ((0, Np - out_f), (0, Kp - in_f)))
            y = pl.pallas_call(
                _noisy_full_kernel,
                grid_spec=pltpu.PrefetchScalarGridSpec(
                    num_scalar_prefetch=0, grid=grid,
                    in_specs=[x_spec, w_spec, w_spec, row_n_spec, row_n_spec],
                    out_specs=o_spec, scratch_shapes=scratch),
                **common)(xp, wp, wn, bp, bnp)

    return y[:B, :out_f]


# ----- deterministic parameter / noise construction (mirrors __init__ + reset_*) -----

def _scale_noise(key, size):
    n = jax.random.normal(key, (size,), dtype=jnp.float32)
    return jnp.sign(n) * jnp.sqrt(jnp.abs(n))


def make_noisy_linear_params(key, in_features, out_features, std_init=0.5):
    kw, kb, knw, knb = jax.random.split(key, 4)
    stdv = 1.0 / (in_features ** 0.5)
    weight = jax.random.uniform(kw, (out_features, in_features),
                                minval=-stdv, maxval=stdv, dtype=jnp.float32)
    bias = jax.random.uniform(kb, (out_features,),
                              minval=-stdv, maxval=stdv, dtype=jnp.float32)
    # reset_noise: per-input-feature noise expanded (rank-1) over all output rows.
    wn_row = _scale_noise(knw, in_features)                       # [in]
    weight_noise = jnp.broadcast_to(wn_row[None, :], (out_features, in_features))
    bias_noise = _scale_noise(knb, out_features)                  # [out]
    # NOTE: noise_std = std_init / sqrt(in_features) is computed in __init__ but unused in forward.
    return weight, weight_noise, bias, bias_noise


if __name__ == "__main__":
    key = jax.random.PRNGKey(0)
    k_param, k_x = jax.random.split(key)

    in_features, out_features, batch = 32, 64, 8
    weight, weight_noise, bias, bias_noise = make_noisy_linear_params(
        k_param, in_features, out_features)
    x = jax.random.normal(k_x, (batch, in_features), dtype=jnp.float32)

    # training-mode forward (rank-1 factorized-noise path, the default)
    y = jax.block_until_ready(
        noisy_linear(x, weight, weight_noise, bias, bias_noise, training=True))
    y_ref = x @ (weight + weight_noise).T + (bias + bias_noise)[None, :]
    assert y.shape == (batch, out_features)
    assert jnp.allclose(y, y_ref, atol=1e-5, rtol=1e-5)

    # training-mode, full-matrix fallback (arbitrary noise buffers)
    y_full = jax.block_until_ready(
        noisy_linear(x, weight, weight_noise, bias, bias_noise,
                     training=True, factorized_noise=False))
    assert jnp.allclose(y_full, y_ref, atol=1e-5, rtol=1e-5)

    # eval-mode forward: statically specialized kernel, no noise inputs at all
    y_eval = jax.block_until_ready(
        noisy_linear(x, weight, weight_noise, bias, bias_noise, training=False))
    y_eval_ref = x @ weight.T + bias[None, :]
    assert jnp.allclose(y_eval, y_eval_ref, atol=1e-5, rtol=1e-5)

    print("KERNEL_OK")
</pallas_src>

<mosaic_0001>
module attributes {stable_mosaic.version = 11 : i64} {
  func.func @_noisy_rank1_kernel(%arg0: i32, %arg1: i32, %arg2: i32, %arg3: memref<8x128xf32, #tpu.memory_space<vmem>>, %arg4: memref<128x128xf32, #tpu.memory_space<vmem>>, %arg5: memref<1x128xf32, #tpu.memory_space<vmem>>, %arg6: memref<1x128xf32, #tpu.memory_space<vmem>>, %arg7: memref<1x128xf32, #tpu.memory_space<vmem>>, %arg8: memref<8x128xf32, #tpu.memory_space<vmem>>, %arg9: memref<8x128xf32, #tpu.memory_space<vmem>>) attributes {dimension_semantics = [#tpu.dimension_semantics<parallel>, #tpu.dimension_semantics<parallel>, #tpu.dimension_semantics<arbitrary>], iteration_bounds = array<i64: 1, 1, 1>, scalar_prefetch = 0 : i64, scratch_operands = 1 : i64, tpu.core_type = #tpu.core_type<tc>, window_params = [{transform_indices = @transform_0, window_bounds = array<i64: 8, 128>}, {transform_indices = @transform_1, window_bounds = array<i64: 128, 128>}, {transform_indices = @transform_2, window_bounds = array<i64: 1, 128>}, {transform_indices = @transform_3, window_bounds = array<i64: 1, 128>}, {transform_indices = @transform_4, window_bounds = array<i64: 1, 128>}, {transform_indices = @transform_5, window_bounds = array<i64: 8, 128>}]} {
    %c0_i32 = arith.constant 0 : i32
    %0 = arith.cmpi eq, %arg2, %c0_i32 : i32
    %1 = arith.extui %0 : i1 to i32
    %c0_i32_0 = arith.constant 0 : i32
    %2 = arith.cmpi ne, %1, %c0_i32_0 : i32
    scf.if %2 {
      %cst_17 = arith.constant 0.000000e+00 : f32
      %21 = vector.broadcast %cst_17 : f32 to vector<8x128xf32>
      %c0_18 = arith.constant 0 : index
      %c0_19 = arith.constant 0 : index
      %22 = vector.load %arg9[%c0_18, %c0_19] : memref<8x128xf32, #tpu.memory_space<vmem>>, vector<8x128xf32>
      tpu.vector_store %arg9[%c0_18, %c0_19], %21 {strides = array<i32>} : memref<8x128xf32, #tpu.memory_space<vmem>>, vector<8x128xf32>,
    } else {
    }
    %c0 = arith.constant 0 : index
    %c0_1 = arith.constant 0 : index
    %3 = vector.load %arg3[%c0, %c0_1] : memref<8x128xf32, #tpu.memory_space<vmem>>, vector<8x128xf32>
    %c0_2 = arith.constant 0 : index
    %c0_3 = arith.constant 0 : index
    %4 = vector.load %arg9[%c0_2, %c0_3] : memref<8x128xf32, #tpu.memory_space<vmem>>, vector<8x128xf32>
    %c0_4 = arith.constant 0 : index
    %c0_5 = arith.constant 0 : index
    %5 = vector.load %arg4[%c0_4, %c0_5] : memref<128x128xf32, #tpu.memory_space<vmem>>, vector<128x128xf32>
    %cst = arith.constant dense<0.000000e+00> : vector<8x128xf32>
    %6 = tpu.matmul %3, %5, %cst {dimension_numbers = #tpu.dot_dimension_numbers<[1], [1], [0], [0], [0, 0, 1, 0], [], []>} : vector<8x128xf32>, vector<128x128xf32>, vector<8x128xf32> -> vector<8x128xf32>
    %7 = arith.addf %4, %6 : vector<8x128xf32>
    %c0_6 = arith.constant 0 : index
    %c0_7 = arith.constant 0 : index
    %8 = vector.load %arg9[%c0_6, %c0_7] : memref<8x128xf32, #tpu.memory_space<vmem>>, vector<8x128xf32>
    tpu.vector_store %arg9[%c0_6, %c0_7], %7 {strides = array<i32>} : memref<8x128xf32, #tpu.memory_space<vmem>>, vector<8x128xf32>,
    %c0_8 = arith.constant 0 : index
    %c0_9 = arith.constant 0 : index
    %9 = vector.load %arg5[%c0_8, %c0_9] : memref<1x128xf32, #tpu.memory_space<vmem>>, vector<1x128xf32>
    %10 = vector.broadcast %9 : vector<1x128xf32> to vector<8x128xf32>
    %11 = arith.mulf %3, %10 : vector<8x128xf32>
    %cst_10 = arith.constant dense<0.000000e+00> : vector<8xf32>
    %12 = vector.multi_reduction <add>, %11, %cst_10 [1] : vector<8x128xf32> to vector<8xf32>
    %13 = vector.shape_cast %12 : vector<8xf32> to vector<8x1xf32>
    %c0_11 = arith.constant 0 : index
    %c0_12 = arith.constant 0 : index
    %14 = vector.load %arg9[%c0_11, %c0_12] : memref<8x128xf32, #tpu.memory_space<vmem>>, vector<8x128xf32>
    %15 = vector.broadcast %13 : vector<8x1xf32> to vector<8x128xf32>
    %16 = arith.addf %14, %15 : vector<8x128xf32>
    %c0_13 = arith.constant 0 : index
    %c0_14 = arith.constant 0 : index
    %17 = vector.load %arg9[%c0_13, %c0_14] : memref<8x128xf32, #tpu.memory_space<vmem>>, vector<8x128xf32>
    tpu.vector_store %arg9[%c0_13, %c0_14], %16 {strides = array<i32>} : memref<8x128xf32, #tpu.memory_space<vmem>>, vector<8x128xf32>,
    %c0_i32_15 = arith.constant 0 : i32
    %18 = arith.cmpi eq, %arg2, %c0_i32_15 : i32
    %19 = arith.extui %18 : i1 to i32
    %c0_i32_16 = arith.constant 0 : i32
    %20 = arith.cmpi ne, %19, %c0_i32_16 : i32
    scf.if %20 {
      %c0_17 = arith.constant 0 : index
      %c0_18 = arith.constant 0 : index
      %21 = vector.load %arg9[%c0_17, %c0_18] : memref<8x128xf32, #tpu.memory_space<vmem>>, vector<8x128xf32>
      %c0_19 = arith.constant 0 : index
      %c0_20 = arith.constant 0 : index
      %22 = vector.load %arg6[%c0_19, %c0_20] : memref<1x128xf32, #tpu.memory_space<vmem>>, vector<1x128xf32>
      %23 = vector.broadcast %22 : vector<1x128xf32> to vector<8x128xf32>
      %24 = arith.addf %21, %23 : vector<8x128xf32>
      %c0_21 = arith.constant 0 : index
      %c0_22 = arith.constant 0 : index
      %25 = vector.load %arg7[%c0_21, %c0_22] : memref<1x128xf32, #tpu.memory_space<vmem>>, vector<1x128xf32>
      %26 = vector.broadcast %25 : vector<1x128xf32> to vector<8x128xf32>
      %27 = arith.addf %24, %26 : vector<8x128xf32>
      %c0_23 = arith.constant 0 : index
      %c0_24 = arith.constant 0 : index
      %28 = vector.load %arg8[%c0_23, %c0_24] : memref<8x128xf32, #tpu.memory_space<vmem>>, vector<8x128xf32>
      tpu.vector_store %arg8[%c0_23, %c0_24], %27 {strides = array<i32>} : memref<8x128xf32, #tpu.memory_space<vmem>>, vector<8x128xf32>,
    } else {
    }
    return
  }
  func.func @transform_0(%arg0: i32, %arg1: i32, %arg2: i32) -> (i32, i32) {
    %c0_i32 = arith.constant 0 : i32
    return %arg0, %arg2 : i32, i32
  }
  func.func @transform_1(%arg0: i32, %arg1: i32, %arg2: i32) -> (i32, i32) {
    %c0_i32 = arith.constant 0 : i32
    return %arg1, %arg2 : i32, i32
  }
  func.func @transform_2(%arg0: i32, %arg1: i32, %arg2: i32) -> (i32, i32) {
    %c0_i32 = arith.constant 0 : i32
    %c0_i32_0 = arith.constant 0 : i32
    return %c0_i32, %arg2 : i32, i32
  }
  func.func @transform_3(%arg0: i32, %arg1: i32, %arg2: i32) -> (i32, i32) {
    %c0_i32 = arith.constant 0 : i32
    %c0_i32_0 = arith.constant 0 : i32
    return %c0_i32, %arg1 : i32, i32
  }
  func.func @transform_4(%arg0: i32, %arg1: i32, %arg2: i32) -> (i32, i32) {
    %c0_i32 = arith.constant 0 : i32
    %c0_i32_0 = arith.constant 0 : i32
    return %c0_i32, %arg1 : i32, i32
  }
  func.func @transform_5(%arg0: i32, %arg1: i32, %arg2: i32) -> (i32, i32) {
    %c0_i32 = arith.constant 0 : i32
    return %arg0, %arg1 : i32, i32
  }
}

</mosaic_0001>

<llo_original>
// kernel: tpu_custom_call.1
$region0: #{tpu_custom_call.1}
  #allocation0 [shape = 'u32[]', space=smem, size = 0x4, offset = 0x4, fixed_abs, tag = 'smem constant byte address 0x4 - core index']
  #allocation1 [shape = 'u32[144,128]{1,0:T(1,128)}', space=vmem, size = 0x12000, scoped, tag = 'internal scratch']
  #allocation2 [shape = 'f32[8,128]{1,0:T(8,128)}', space=vmem, size = 0x1000, scoped, tag = 'scratch operand']
  %s0 = inlined_call_operand.hbm [shape: f32[8,128], index: 0, kind: input, shape index: {}]
  %s1 = inlined_call_operand.hbm [shape: f32[128,128], index: 1, kind: input, shape index: {}]
  %s2 = inlined_call_operand.vmem [shape: f32[1,128], index: 2, kind: input, shape index: {}]
  %s3 = inlined_call_operand.vmem [shape: f32[1,128], index: 3, kind: input, shape index: {}]
  %s4 = inlined_call_operand.vmem [shape: f32[1,128], index: 4, kind: input, shape index: {}]
  %s5 = inlined_call_operand.hbm [shape: f32[8,128], index: 5, kind: output, shape index: {}]
  %s6 = sld [smem:[#allocation0]]
  $region46: #{tpu_custom_call.1} parent=0
    _
  %s8 = ssub.s32 1, %s6
  %s9 = scalar_select 0, %s8, %s6
  $region1: #{tpu_custom_call.1} parent=0
    #allocation3 [shape = 'u8[4096]{0}', space=vmem, size = 0x1000, scoped, tag = 'input window, operand 0, single buffered']
    #allocation4 [shape = 's32[1]{0}', space=sflag, size = 0x4, scoped, tag = 'scoped memory for tpu_custom_call.1']
    #allocation5 [shape = 's32[1]{0}', space=sflag, size = 0x4, scoped, tag = 'scoped memory for tpu_custom_call.1']
    #allocation6 [shape = 'u8[65536]{0}', space=vmem, size = 0x10000, scoped, tag = 'input window, operand 1, single buffered']
    #allocation7 [shape = 's32[1]{0}', space=sflag, size = 0x4, scoped, tag = 'scoped memory for tpu_custom_call.1']
    #allocation8 [shape = 'u8[4096]{0}', space=vmem, size = 0x1000, scoped, tag = 'output window, operand 0, single buffered']
    %10 = vsyncpa [#allocation4], 0
    %11 = vsyncpa [#allocation7], 0
    %12 = vsyncpa [#allocation5], 0
    // Predicated region
    $region2: #{tpu_custom_call.1} parent=1 // pred_check
      _
    $region3: #{tpu_custom_call.1} parent=1 // pred_check_branch
      %14 = sbr.rel (0) target = $region5
    $region4: #{tpu_custom_call.1} parent=1 // pred_region
      %s16 = ssub.s32 128, 128
      %17 = vsyncadd [#allocation4], %s16
      %s19 = sshll.u32 [#allocation3], 4
      %s20 = int_to_ptr.vmem [resolvable:$true] %s19
      %22 = dma.hbm_to_vmem [thread:$0]  %s0, 128, %s20, [#allocation4]
    $region5: #{tpu_custom_call.1} parent=1 // pred_fallthru
      _
    // Predicated region
    $region6: #{tpu_custom_call.1} parent=1 // pred_check
      _
    $region7: #{tpu_custom_call.1} parent=1 // pred_check_branch
      %24 = sbr.rel (0) target = $region9
    $region8: #{tpu_custom_call.1} parent=1 // pred_region
      %s26 = ssub.s32 2048, 2048
      %27 = vsyncadd [#allocation7], %s26
      %s28 = sshll.u32 [#allocation6], 4
      %s29 = int_to_ptr.vmem [resolvable:$true] %s28
      %34 = dma.hbm_to_vmem [thread:$0]  %s1, 2048, %s29, [#allocation7], 128, 128, 8
    $region9: #{tpu_custom_call.1} parent=1 // pred_fallthru
      _
    // Predicated region
    $region10: #{tpu_custom_call.1} parent=1 // pred_check
      _
    $region11: #{tpu_custom_call.1} parent=1 // pred_check_branch
      %36 = sbr.rel (0) target = $region13
    $region12: #{tpu_custom_call.1} parent=1 // pred_region
      _
    $region13: #{tpu_custom_call.1} parent=1 // pred_fallthru
      _
    // Predicated region
    $region14: #{tpu_custom_call.1} parent=1 // pred_check
      _
    $region15: #{tpu_custom_call.1} parent=1 // pred_check_branch
      %38 = sbr.rel (0) target = $region17
    $region16: #{tpu_custom_call.1} parent=1 // pred_region
      _
    $region17: #{tpu_custom_call.1} parent=1 // pred_fallthru
      _
    // Predicated region
    $region18: #{tpu_custom_call.1} parent=1 // pred_check
      _
    $region19: #{tpu_custom_call.1} parent=1 // pred_check_branch
      %40 = sbr.rel (0) target = $region21
    $region20: #{tpu_custom_call.1} parent=1 // pred_region
      _
    $region21: #{tpu_custom_call.1} parent=1 // pred_fallthru
      _
    // Predicated region
    $region22: #{tpu_custom_call.1} parent=1 // pred_check
      _
    $region23: #{tpu_custom_call.1} parent=1 // pred_check_branch
      %42 = sbr.rel (0) target = $region25
    $region24: #{tpu_custom_call.1} parent=1 // pred_region
      %43 = dma.done [#allocation4], 128
    $region25: #{tpu_custom_call.1} parent=1 // pred_fallthru
      _
    // Predicated region
    $region26: #{tpu_custom_call.1} parent=1 // pred_check
      _
    $region27: #{tpu_custom_call.1} parent=1 // pred_check_branch
      %45 = sbr.rel (0) target = $region29
    $region28: #{tpu_custom_call.1} parent=1 // pred_region
      %46 = dma.done [#allocation7], 2048
    $region29: #{tpu_custom_call.1} parent=1 // pred_fallthru
      _
    %p47 = scmp.eq.s32.totalorder 0, 0
    // Predicated region
    $region30: #{tpu_custom_call.1} parent=1 // pred_check
      %p48 = pneg %p47
    $region31: #{tpu_custom_call.1} parent=1 // pred_check_branch
      %50 = sbr.rel (%p48) target = $region33
    $region32: #{tpu_custom_call.1} parent=1 // pred_region
      %51 = vst [vmem:[#allocation2] sm:$0xff] 0.0
    $region33: #{tpu_custom_call.1} parent=1 // pred_fallthru
      _
    %v52 = vld [vmem:[#allocation3] sm:$0xff]
    %v53 = vld [vmem:[#allocation2] sm:$0xff]
    %v54 = vld [vmem:[#allocation6] sm:$0xff]
    %v55 = vld [vmem:[#allocation6 + $0x8] sm:$0xff]
    %v56 = vld [vmem:[#allocation6 + $0x10] sm:$0xff]
    %v57 = vld [vmem:[#allocation6 + $0x18] sm:$0xff]
    %v58 = vld [vmem:[#allocation6 + $0x20] sm:$0xff]
    %v59 = vld [vmem:[#allocation6 + $0x28] sm:$0xff]
    %v60 = vld [vmem:[#allocation6 + $0x30] sm:$0xff]
    %v61 = vld [vmem:[#allocation6 + $0x38] sm:$0xff]
    %v62 = vld [vmem:[#allocation6 + $0x40] sm:$0xff]
    %v63 = vld [vmem:[#allocation6 + $0x48] sm:$0xff]
    %v64 = vld [vmem:[#allocation6 + $0x50] sm:$0xff]
    %v65 = vld [vmem:[#allocation6 + $0x58] sm:$0xff]
    %v66 = vld [vmem:[#allocation6 + $0x60] sm:$0xff]
    %v67 = vld [vmem:[#allocation6 + $0x68] sm:$0xff]
    %v68 = vld [vmem:[#allocation6 + $0x70] sm:$0xff]
    %v69 = vld [vmem:[#allocation6 + $0x78] sm:$0xff]
    %70 = vmatprep.subr.mxu0 0.0
    %71 = vmatpush1.xpose.msra.mxu0 %v54
    %72 = vmatprep.subr.mxu0 0.0
    %73 = vmatpush1.xpose.msra.mxu0 %v55
    %74 = vmatprep.subr.mxu0 0.0
    %75 = vmatpush1.xpose.msra.mxu0 %v56
    %76 = vmatprep.subr.mxu0 0.0
    %77 = vmatpush1.xpose.msra.mxu0 %v57
    %78 = vmatprep.subr.mxu0 0.0
    %79 = vmatpush1.xpose.msra.mxu0 %v58
    %80 = vmatprep.subr.mxu0 0.0
    %81 = vmatpush1.xpose.msra.mxu0 %v59
    %82 = vmatprep.subr.mxu0 0.0
    %83 = vmatpush1.xpose.msra.mxu0 %v60
    %84 = vmatprep.subr.mxu0 0.0
    %85 = vmatpush1.xpose.msra.mxu0 %v61
    %86 = vmatprep.subr.mxu0 0.0
    %87 = vmatpush1.xpose.msra.mxu0 %v62
    %88 = vmatprep.subr.mxu0 0.0
    %89 = vmatpush1.xpose.msra.mxu0 %v63
    %90 = vmatprep.subr.mxu0 0.0
    %91 = vmatpush1.xpose.msra.mxu0 %v64
    %92 = vmatprep.subr.mxu0 0.0
    %93 = vmatpush1.xpose.msra.mxu0 %v65
    %94 = vmatprep.subr.mxu0 0.0
    %95 = vmatpush1.xpose.msra.mxu0 %v66
    %96 = vmatprep.subr.mxu0 0.0
    %97 = vmatpush1.xpose.msra.mxu0 %v67
    %98 = vmatprep.subr.mxu0 0.0
    %99 = vmatpush1.xpose.msra.mxu0 %v68
    %100 = vmatprep.subr.mxu0 0.0
    %101 = vmatpush1.xpose.msra.mxu0 %v69
    %102 = vmatprep.subr.mxu0 0.0
    %103 = vmatpush1.xpose.msra.mxu0 0.0
    %104 = vmatprep.subr.mxu0 0.0
    %105 = vmatpush1.xpose.msra.mxu0 0.0
    %106 = vmatprep.subr.mxu0 0.0
    %107 = vmatpush1.xpose.msra.mxu0 0.0
    %108 = vmatprep.subr.mxu0 0.0
    %109 = vmatpush1.xpose.msra.mxu0 0.0
    %110 = vmatprep.subr.mxu0 0.0
    %111 = vmatpush1.xpose.msra.mxu0 0.0
    %112 = vmatprep.subr.mxu0 0.0
    %113 = vmatpush1.xpose.msra.mxu0 0.0
    %114 = vmatprep.subr.mxu0 0.0
    %115 = vmatpush1.xpose.msra.mxu0 0.0
    %116 = vmatprep.subr.mxu0 0.0
    %117 = vmatpush1.xpose.msra.mxu0 0.0
    %118 = vmatprep.subr.mxu0 0.0
    %119 = vmatpush1.xpose.msra.mxu0 0.0
    %120 = vmatprep.subr.mxu0 0.0
    %121 = vmatpush1.xpose.msra.mxu0 0.0
    %122 = vmatprep.subr.mxu0 0.0
    %123 = vmatpush1.xpose.msra.mxu0 0.0
    %124 = vmatprep.subr.mxu0 0.0
    %125 = vmatpush1.xpose.msra.mxu0 0.0
    %126 = vmatprep.subr.mxu0 0.0
    %127 = vmatpush1.xpose.msra.mxu0 0.0
    %128 = vmatprep.subr.mxu0 0.0
    %129 = vmatpush1.xpose.msra.mxu0 0.0
    %130 = vmatprep.subr.mxu0 0.0
    %131 = vmatpush1.xpose.msra.mxu0 0.0
    %132 = vmatprep.subr.mxu0 0.0
    %133 = vmatpush1.xpose.msra.mxu0 0.0
    %134 = vmatprep.mubr.f32.mxu0 0.0
    %135 = vmatmul.mubr.f32.gmra.mrb[0].mxu0 %v52
    %v136 = vpop.f32.mrb[0].mxu0
    %v137 = vadd.f32 0.0, %v136
    %v138 = vpop.f32.mrb[0].mxu0
    %139 = vdwg.mxu0
    %v140 = vadd.f32 %v53, %v137
    %141 = vst [vmem:[#allocation2] sm:$0xff] %v140
    %v142 = vld [vmem:[%s2] sm:$0x1]
    %v144 = vlaneseq
    %v145 = vshrl.u32 %v144, 7
    %v146 = vsub.s32 0, %v145
    %v147 = vrot.slane %v142, %v146
    %v149 = vmul.f32 %v52, %v147
    %150 = vadd.xlane.f32.xlu0 %v149
    %v151 = vpop.xlane.xlu0 %150
    %v152 = vld [vmem:[#allocation2] sm:$0xff]
    %v153 = vadd.f32 %v152, %v151
    %154 = vst [vmem:[#allocation2] sm:$0xff] %v153
    // Predicated region
    $region34: #{tpu_custom_call.1} parent=1 // pred_check
      %p155 = pneg %p47
    $region35: #{tpu_custom_call.1} parent=1 // pred_check_branch
      %157 = sbr.rel (%p155) target = $region37
    $region36: #{tpu_custom_call.1} parent=1 // pred_region
      %v158 = vld [vmem:[#allocation2] sm:$0xff]
      %v159 = vld [vmem:[%s3] sm:$0x1]
      %v161 = vlaneseq
      %v162 = vshrl.u32 %v161, 7
      %v163 = vsub.s32 0, %v162
      %v164 = vrot.slane %v159, %v163
      %v166 = vadd.f32 %v158, %v164
      %v167 = vld [vmem:[%s4] sm:$0x1]
      %v169 = vlaneseq
      %v170 = vshrl.u32 %v169, 7
      %v171 = vsub.s32 0, %v170
      %v172 = vrot.slane %v167, %v171
      %v174 = vadd.f32 %v166, %v172
      %175 = vst [vmem:[#allocation8] sm:$0xff] %v174
    $region37: #{tpu_custom_call.1} parent=1 // pred_fallthru
      _
    // Predicated region
    $region38: #{tpu_custom_call.1} parent=1 // pred_check
      _
    $region39: #{tpu_custom_call.1} parent=1 // pred_check_branch
      %177 = sbr.rel (0) target = $region41
    $region40: #{tpu_custom_call.1} parent=1 // pred_region
      %s179 = ssub.s32 128, 128
      %180 = vsyncadd [#allocation5], %s179
      %s182 = sshll.u32 [#allocation8], 4
      %s183 = int_to_ptr.vmem [resolvable:$true] %s182
      %185 = dma.vmem_to_hbm [thread:$0]  %s183, 128, %s5, [#allocation5]
    $region41: #{tpu_custom_call.1} parent=1 // pred_fallthru
      _
    // Predicated region
    $region42: #{tpu_custom_call.1} parent=1 // pred_check
      _
    $region43: #{tpu_custom_call.1} parent=1 // pred_check_branch
      %187 = sbr.rel (0) target = $region45
    $region44: #{tpu_custom_call.1} parent=1 // pred_region
      %188 = dma.done [#allocation5], 128
    $region45: #{tpu_custom_call.1} parent=1 // pred_fallthru
      _
    %189 = vsyncpa [#allocation4], 1
    %190 = vsyncpa [#allocation7], 1
    %191 = vsyncpa [#allocation5], 1

</llo_original>
